<compile_context>
chip_gen: v5e
topology: v5e:2x2
jax: 0.10.0
libtpu: 0.0.40
codegen_flags: <defaults>
</compile_context>

<pallas_src>
import functools

import jax
import jax.numpy as jnp
import numpy as np
from jax.experimental import pallas as pl
from jax.experimental.pallas import tpu as pltpu


def _cdiv(a, b):
    return -(-a // b)


def _round_up(a, b):
    return _cdiv(a, b) * b


_MAX_BLOCK_ROWS = 512  # 512 rows * 128 lanes * 4 B = 256 KiB per operand block


def _choose_rows(rp_raw, batch):
    """Pick (block_rows, padded_rows).  rp_raw is a multiple of 8."""
    nb = max(1, _cdiv(rp_raw, _MAX_BLOCK_ROWS))
    # Keep >=2 grid blocks when possible so both v7x TensorCores get work.
    if batch * nb < 2 and rp_raw >= 16:
        nb = 2
    rb = _round_up(_cdiv(rp_raw, nb), 8)
    return rb, rb * nb


def _decode_bbox_kernel(pred_ref, actr_ref, awh_ref, out_ref, *, mean, std):
    """Flat interleaved decode.

    All refs are (rows, 128) f32 views of the flat [.., 4*N] layout: lane j of
    row r holds flat element f = r*128 + j, coordinate slot c = f % 4 with
    c -> (dx, dy, dw, dh) for predictions, (cx, cy, cx, cy) / (w, h, w, h) for
    the pre-expanded anchors, and (x1, y1, x2, y2) for the output.
    """
    p = pred_ref[...]
    a_ctr = actr_ref[...]           # [cx, cy, cx, cy] per anchor
    a_wh = awh_ref[...]             # [w,  h,  w,  h ] per anchor

    lane = jax.lax.broadcasted_iota(jnp.int32, p.shape, 1)
    c = lane & 3                    # coordinate slot within the anchor
    is_xy = c < 2
    even_anchor = (lane & 4) == 0   # parity of the anchor within the 128-lane row

    m0, m1, m2, m3 = (np.float32(v) for v in mean)
    s0, s1, s2, s3 = (np.float32(v) for v in std)
    mean_v = jnp.where(c == 0, m0, jnp.where(c == 1, m1, jnp.where(c == 2, m2, m3)))
    std_v = jnp.where(c == 0, s0, jnp.where(c == 1, s1, jnp.where(c == 2, s2, s3)))
    t = p * std_v + mean_v          # [dx', dy', dw', dh'] interleaved

    # Pair swap: t_sw[j] = t[j ^ 2] (swap the xy pair with the wh pair of each
    # anchor).  Summing BOTH roll directions of parity-masked copies makes the
    # result independent of the roll sign convention: the wrong-direction term
    # always comes from an adjacent anchor of opposite parity, which is zeroed.
    n_lanes = p.shape[-1]           # always 128
    zero = jnp.zeros_like(t)
    t_e = jnp.where(even_anchor, t, zero)
    t_o = t - t_e
    sw_e = pltpu.roll(t_e, 2, 1) + pltpu.roll(t_e, n_lanes - 2, 1)
    sw_o = pltpu.roll(t_o, 2, 1) + pltpu.roll(t_o, n_lanes - 2, 1)
    t_sw = jnp.where(even_anchor, sw_e, sw_o)

    u = jnp.where(is_xy, t, t_sw)   # dx'/dy' broadcast to all 4 coordinate slots
    v = jnp.where(is_xy, t_sw, t)   # dw'/dh' broadcast to all 4 coordinate slots
    half = jnp.where(is_xy, np.float32(-0.5), np.float32(0.5))
    # c=0: cx + w*(dx' - 0.5*exp(dw')) = x1 ; c=2: cx + w*(dx' + 0.5*exp(dw')) = x2
    out_ref[...] = a_ctr + a_wh * (u + half * jnp.exp(v))


@functools.partial(jax.jit, static_argnames=("mean", "std", "block_rows"))
def _decode_bbox(predicts, anc_ctr, anc_wh, *, mean, std, block_rows):
    """predicts: [B, N, 4]; anc_ctr/anc_wh: [rows_padded, 128] -> [B, N, 4] xyxy."""
    B, N, _ = predicts.shape
    rp = anc_ctr.shape[0]
    f = 4 * N
    fp = rp * 128

    # Contiguous reshape (no transpose / HBM relayout), pad only the flat tail.
    flat = predicts.astype(jnp.float32).reshape(B, f)
    if fp != f:
        flat = jnp.pad(flat, ((0, 0), (0, fp - f)))
    pred3 = flat.reshape(B, rp, 128)

    nb = rp // block_rows
    kernel = functools.partial(_decode_bbox_kernel, mean=mean, std=std)
    out3 = pl.pallas_call(
        kernel,
        out_shape=jax.ShapeDtypeStruct((B, rp, 128), jnp.float32),
        grid_spec=pltpu.PrefetchScalarGridSpec(
            num_scalar_prefetch=0,
            grid=(nb, B),  # rows outer, batch inner -> anchor blocks stay resident
            in_specs=[
                pl.BlockSpec((pl.Squeezed(), block_rows, 128), lambda n, b: (b, n, 0)),
                pl.BlockSpec((block_rows, 128), lambda n, b: (n, 0)),
                pl.BlockSpec((block_rows, 128), lambda n, b: (n, 0)),
            ],
            out_specs=pl.BlockSpec((pl.Squeezed(), block_rows, 128),
                                   lambda n, b: (b, n, 0)),
        ),
        compiler_params=pltpu.CompilerParams(
            dimension_semantics=("parallel", "arbitrary")),
    )(pred3, anc_ctr, anc_wh)

    return out3.reshape(B, fp)[:, :f].reshape(B, N, 4)


def _prepare_anchors(anchors_xywh, rp):
    """One-time prep: [N,4] xywh -> flat interleaved (rp,128) ctr / wh arrays."""
    n = anchors_xywh.shape[0]
    fp = rp * 128
    a = jnp.asarray(anchors_xywh, jnp.float32)
    ctr = jnp.tile(a[:, 0:2], (1, 2)).reshape(-1)   # [cx, cy, cx, cy] per anchor
    wh = jnp.tile(a[:, 2:4], (1, 2)).reshape(-1)    # [w,  h,  w,  h ] per anchor
    pad = fp - 4 * n
    if pad:
        ctr = jnp.pad(ctr, (0, pad))
        wh = jnp.pad(wh, (0, pad))
    return ctr.reshape(rp, 128), wh.reshape(rp, 128)


class DecodeBBox:
    """JAX/Pallas mirror of the PyTorch DecodeBBox module.

    forward(predicts[B,N,4], anchors_xywh[N,4]) -> xyxy boxes [B,N,4].
    Anchors are static per model: their flat-interleaved layout is prepared
    once and cached (the original array is kept alive in the cache entry so the
    id-based key can never alias a garbage-collected array).
    """

    def __init__(self, mean=None, std=None):
        mean = np.array([0.0, 0.0, 0.0, 0.0], np.float32) if mean is None else \
            np.asarray(mean, np.float32)
        std = np.array([0.1, 0.1, 0.2, 0.2], np.float32) if std is None else \
            np.asarray(std, np.float32)
        self.mean = tuple(float(v) for v in mean.reshape(-1)[:4])
        self.std = tuple(float(v) for v in std.reshape(-1)[:4])
        self._anc_cache = {}

    def __call__(self, predicts, anchors_xywh):
        B, N, _ = predicts.shape
        rp_raw = _round_up(_cdiv(4 * N, 128), 8)
        block_rows, rp = _choose_rows(rp_raw, B)
        key = (id(anchors_xywh), int(N), int(rp))
        hit = self._anc_cache.get(key)
        if hit is None or hit[0] is not anchors_xywh:
            hit = (anchors_xywh, _prepare_anchors(anchors_xywh, rp))
            self._anc_cache[key] = hit  # keeps a ref -> id stays valid
        anc_ctr, anc_wh = hit[1]
        return _decode_bbox(predicts, anc_ctr, anc_wh,
                            mean=self.mean, std=self.std, block_rows=block_rows)


def decode_bbox_ref(predicts, anchors_xywh, mean, std):
    """Pure-JAX reference mirroring the PyTorch forward."""
    a_w = anchors_xywh[..., 2]
    a_h = anchors_xywh[..., 3]
    ctr_x = anchors_xywh[..., 0]
    ctr_y = anchors_xywh[..., 1]
    dx = predicts[:, :, 0] * std[0] + mean[0]
    dy = predicts[:, :, 1] * std[1] + mean[1]
    dw = predicts[:, :, 2] * std[2] + mean[2]
    dh = predicts[:, :, 3] * std[3] + mean[3]
    pred_ctr_x = ctr_x + dx * a_w
    pred_ctr_y = ctr_y + dy * a_h
    pred_w = jnp.exp(dw) * a_w
    pred_h = jnp.exp(dh) * a_h
    x1 = pred_ctr_x - 0.5 * pred_w
    y1 = pred_ctr_y - 0.5 * pred_h
    x2 = pred_ctr_x + 0.5 * pred_w
    y2 = pred_ctr_y + 0.5 * pred_h
    return jnp.stack([x1, y1, x2, y2], axis=-1)


if __name__ == "__main__":
    decoder = DecodeBBox()  # default mean/std
    key = jax.random.PRNGKey(0)

    def make_inputs(key, B, N):
        k1, k2, k3 = jax.random.split(key, 3)
        predicts = jax.random.normal(k1, (B, N, 4), dtype=jnp.float32)
        anc_ctr = jax.random.uniform(k2, (N, 2), minval=0.0, maxval=64.0)
        anc_wh = jax.random.uniform(k3, (N, 2), minval=4.0, maxval=32.0)
        anchors = jnp.concatenate([anc_ctr, anc_wh], axis=-1).astype(jnp.float32)
        return predicts, anchors

    mean_v = jnp.asarray(decoder.mean, jnp.float32)
    std_v = jnp.asarray(decoder.std, jnp.float32)

    # Case 1: B=2, N not a multiple of anything nice (exercises flat-tail padding).
    k_a, k_b = jax.random.split(key)
    predicts, anchors = make_inputs(k_a, B=2, N=200)
    out = jax.block_until_ready(decoder(predicts, anchors))
    ref = decode_bbox_ref(predicts, anchors, mean_v, std_v)
    np.testing.assert_allclose(np.asarray(out), np.asarray(ref), rtol=1e-5, atol=1e-4)
    assert out.shape == (2, 200, 4) and out.dtype == jnp.float32

    # Case 2: B=1 (exercises the >=2 row-blocks split for the two-TC case).
    predicts2, anchors2 = make_inputs(k_b, B=1, N=1000)
    out2 = jax.block_until_ready(decoder(predicts2, anchors2))
    ref2 = decode_bbox_ref(predicts2, anchors2, mean_v, std_v)
    np.testing.assert_allclose(np.asarray(out2), np.asarray(ref2), rtol=1e-5, atol=1e-4)
    assert out2.shape == (1, 1000, 4) and out2.dtype == jnp.float32

    print("KERNEL_OK")
</pallas_src>

<mosaic_0001>
module attributes {stable_mosaic.version = 11 : i64} {
  func.func @_decode_bbox_kernel(%arg0: i32, %arg1: i32, %arg2: memref<1x8x128xf32, #tpu.memory_space<vmem>>, %arg3: memref<8x128xf32, #tpu.memory_space<vmem>>, %arg4: memref<8x128xf32, #tpu.memory_space<vmem>>, %arg5: memref<1x8x128xf32, #tpu.memory_space<vmem>>) attributes {dimension_semantics = [#tpu.dimension_semantics<parallel>, #tpu.dimension_semantics<arbitrary>], iteration_bounds = array<i64: 1, 2>, scalar_prefetch = 0 : i64, scratch_operands = 0 : i64, tpu.core_type = #tpu.core_type<tc>, window_params = [{transform_indices = @transform_0, window_bounds = array<i64: 1, 8, 128>}, {transform_indices = @transform_1, window_bounds = array<i64: 8, 128>}, {transform_indices = @transform_2, window_bounds = array<i64: 8, 128>}, {transform_indices = @transform_3, window_bounds = array<i64: 1, 8, 128>}]} {
    %c0 = arith.constant 0 : index
    %c0_0 = arith.constant 0 : index
    %c0_1 = arith.constant 0 : index
    %0 = vector.load %arg2[%c0, %c0_0, %c0_1] : memref<1x8x128xf32, #tpu.memory_space<vmem>>, vector<1x8x128xf32>
    %1 = vector.shape_cast %0 : vector<1x8x128xf32> to vector<8x128xf32>
    %c0_2 = arith.constant 0 : index
    %c0_3 = arith.constant 0 : index
    %2 = vector.load %arg3[%c0_2, %c0_3] : memref<8x128xf32, #tpu.memory_space<vmem>>, vector<8x128xf32>
    %c0_4 = arith.constant 0 : index
    %c0_5 = arith.constant 0 : index
    %3 = vector.load %arg4[%c0_4, %c0_5] : memref<8x128xf32, #tpu.memory_space<vmem>>, vector<8x128xf32>
    %4 = tpu.iota {dimensions = array<i32: 1>} : vector<8x128xi32>
    %c3_i32 = arith.constant 3 : i32
    %5 = vector.broadcast %c3_i32 : i32 to vector<8x128xi32>
    %6 = arith.andi %4, %5 : vector<8x128xi32>
    %c2_i32 = arith.constant 2 : i32
    %7 = vector.broadcast %c2_i32 : i32 to vector<8x128xi32>
    %8 = arith.cmpi slt, %6, %7 : vector<8x128xi32>
    %c4_i32 = arith.constant 4 : i32
    %9 = vector.broadcast %c4_i32 : i32 to vector<8x128xi32>
    %10 = arith.andi %4, %9 : vector<8x128xi32>
    %c0_i32 = arith.constant 0 : i32
    %11 = vector.broadcast %c0_i32 : i32 to vector<8x128xi32>
    %12 = arith.cmpi eq, %10, %11 : vector<8x128xi32>
    %c0_i32_6 = arith.constant 0 : i32
    %13 = vector.broadcast %c0_i32_6 : i32 to vector<8x128xi32>
    %14 = arith.cmpi eq, %6, %13 : vector<8x128xi32>
    %c1_i32 = arith.constant 1 : i32
    %15 = vector.broadcast %c1_i32 : i32 to vector<8x128xi32>
    %16 = arith.cmpi eq, %6, %15 : vector<8x128xi32>
    %c2_i32_7 = arith.constant 2 : i32
    %17 = vector.broadcast %c2_i32_7 : i32 to vector<8x128xi32>
    %18 = arith.cmpi eq, %6, %17 : vector<8x128xi32>
    %cst = arith.constant 0.000000e+00 : f32
    %cst_8 = arith.constant 0.000000e+00 : f32
    %19 = vector.broadcast %cst : f32 to vector<8x128xf32>
    %20 = vector.broadcast %cst_8 : f32 to vector<8x128xf32>
    %21 = arith.select %18, %19, %20 : vector<8x128xi1>, vector<8x128xf32>
    %cst_9 = arith.constant 0.000000e+00 : f32
    %22 = vector.broadcast %cst_9 : f32 to vector<8x128xf32>
    %23 = arith.select %16, %22, %21 : vector<8x128xi1>, vector<8x128xf32>
    %cst_10 = arith.constant 0.000000e+00 : f32
    %24 = vector.broadcast %cst_10 : f32 to vector<8x128xf32>
    %25 = arith.select %14, %24, %23 : vector<8x128xi1>, vector<8x128xf32>
    %c0_i32_11 = arith.constant 0 : i32
    %26 = vector.broadcast %c0_i32_11 : i32 to vector<8x128xi32>
    %27 = arith.cmpi eq, %6, %26 : vector<8x128xi32>
    %c1_i32_12 = arith.constant 1 : i32
    %28 = vector.broadcast %c1_i32_12 : i32 to vector<8x128xi32>
    %29 = arith.cmpi eq, %6, %28 : vector<8x128xi32>
    %c2_i32_13 = arith.constant 2 : i32
    %30 = vector.broadcast %c2_i32_13 : i32 to vector<8x128xi32>
    %31 = arith.cmpi eq, %6, %30 : vector<8x128xi32>
    %cst_14 = arith.constant 2.000000e-01 : f32
    %cst_15 = arith.constant 2.000000e-01 : f32
    %32 = vector.broadcast %cst_14 : f32 to vector<8x128xf32>
    %33 = vector.broadcast %cst_15 : f32 to vector<8x128xf32>
    %34 = arith.select %31, %32, %33 : vector<8x128xi1>, vector<8x128xf32>
    %cst_16 = arith.constant 1.000000e-01 : f32
    %35 = vector.broadcast %cst_16 : f32 to vector<8x128xf32>
    %36 = arith.select %29, %35, %34 : vector<8x128xi1>, vector<8x128xf32>
    %cst_17 = arith.constant 1.000000e-01 : f32
    %37 = vector.broadcast %cst_17 : f32 to vector<8x128xf32>
    %38 = arith.select %27, %37, %36 : vector<8x128xi1>, vector<8x128xf32>
    %39 = arith.mulf %1, %38 : vector<8x128xf32>
    %40 = arith.addf %39, %25 : vector<8x128xf32>
    %cst_18 = arith.constant 0.000000e+00 : f32
    %41 = vector.broadcast %cst_18 : f32 to vector<8x128xf32>
    %42 = arith.select %12, %40, %41 : vector<8x128xi1>, vector<8x128xf32>
    %43 = arith.subf %40, %42 : vector<8x128xf32>
    %c2_i32_19 = arith.constant 2 : i32
    %44 = tpu.dynamic_rotate %42 by %c2_i32_19 dim 1 : vector<8x128xf32>, i32 -> vector<8x128xf32>
    %c126_i32 = arith.constant 126 : i32
    %45 = tpu.dynamic_rotate %42 by %c126_i32 dim 1 : vector<8x128xf32>, i32 -> vector<8x128xf32>
    %46 = arith.addf %44, %45 : vector<8x128xf32>
    %c2_i32_20 = arith.constant 2 : i32
    %47 = tpu.dynamic_rotate %43 by %c2_i32_20 dim 1 : vector<8x128xf32>, i32 -> vector<8x128xf32>
    %c126_i32_21 = arith.constant 126 : i32
    %48 = tpu.dynamic_rotate %43 by %c126_i32_21 dim 1 : vector<8x128xf32>, i32 -> vector<8x128xf32>
    %49 = arith.addf %47, %48 : vector<8x128xf32>
    %50 = arith.select %12, %46, %49 : vector<8x128xi1>, vector<8x128xf32>
    %51 = arith.select %8, %40, %50 : vector<8x128xi1>, vector<8x128xf32>
    %52 = arith.select %8, %50, %40 : vector<8x128xi1>, vector<8x128xf32>
    %cst_22 = arith.constant -5.000000e-01 : f32
    %cst_23 = arith.constant 5.000000e-01 : f32
    %53 = vector.broadcast %cst_22 : f32 to vector<8x128xf32>
    %54 = vector.broadcast %cst_23 : f32 to vector<8x128xf32>
    %55 = arith.select %8, %53, %54 : vector<8x128xi1>, vector<8x128xf32>
    %56 = math.exp %52 : vector<8x128xf32>
    %57 = arith.mulf %55, %56 : vector<8x128xf32>
    %58 = arith.addf %51, %57 : vector<8x128xf32>
    %59 = arith.mulf %3, %58 : vector<8x128xf32>
    %60 = arith.addf %2, %59 : vector<8x128xf32>
    %c0_24 = arith.constant 0 : index
    %c0_25 = arith.constant 0 : index
    %c0_26 = arith.constant 0 : index
    %61 = vector.load %arg5[%c0_24, %c0_25, %c0_26] : memref<1x8x128xf32, #tpu.memory_space<vmem>>, vector<1x8x128xf32>
    %62 = vector.shape_cast %61 : vector<1x8x128xf32> to vector<8x128xf32>
    %63 = vector.shape_cast %60 : vector<8x128xf32> to vector<1x8x128xf32>
    tpu.vector_store %arg5[%c0_24, %c0_25, %c0_26], %63 {strides = array<i32>} : memref<1x8x128xf32, #tpu.memory_space<vmem>>, vector<1x8x128xf32>,
    return
  }
  func.func @transform_0(%arg0: i32, %arg1: i32) -> (i32, i32, i32) {
    %c0_i32 = arith.constant 0 : i32
    %c0_i32_0 = arith.constant 0 : i32
    return %arg1, %arg0, %c0_i32 : i32, i32, i32
  }
  func.func @transform_1(%arg0: i32, %arg1: i32) -> (i32, i32) {
    %c0_i32 = arith.constant 0 : i32
    %c0_i32_0 = arith.constant 0 : i32
    return %arg0, %c0_i32 : i32, i32
  }
  func.func @transform_2(%arg0: i32, %arg1: i32) -> (i32, i32) {
    %c0_i32 = arith.constant 0 : i32
    %c0_i32_0 = arith.constant 0 : i32
    return %arg0, %c0_i32 : i32, i32
  }
  func.func @transform_3(%arg0: i32, %arg1: i32) -> (i32, i32, i32) {
    %c0_i32 = arith.constant 0 : i32
    %c0_i32_0 = arith.constant 0 : i32
    return %arg1, %arg0, %c0_i32 : i32, i32, i32
  }
}

</mosaic_0001>

<llo_original>
// kernel: _decode_bbox.1
$region0: #{_decode_bbox.1}
  #allocation0 [shape = 'u32[]', space=smem, size = 0x4, offset = 0x4, fixed_abs, tag = 'smem constant byte address 0x4 - core index']
  #allocation1 [shape = 'u32[72,128]{1,0:T(1,128)}', space=vmem, size = 0x9000, scoped, tag = 'internal scratch']
  %s0 = inlined_call_operand.vmem [shape: f32[2,8,128], index: 0, kind: input, shape index: {}]
  %s1 = inlined_call_operand.vmem [shape: f32[8,128], index: 1, kind: input, shape index: {}]
  %s2 = inlined_call_operand.vmem [shape: f32[8,128], index: 2, kind: input, shape index: {}]
  %s3 = inlined_call_operand.vmem [shape: f32[2,8,128], index: 3, kind: output, shape index: {}]
  %s4 = sld [smem:[#allocation0]]
  $region45: #{_decode_bbox.1} parent=0
    _
  %s6 = ssub.s32 1, %s4
  %s7 = scalar_select 0, %s6, %s4
  loop: start=0, step=1, limit=4
  $region2: #{_decode_bbox.1} parent=0 // loop_pre_header
    _
  $region3: #{_decode_bbox.1} parent=0 // loop_header
    %s9 = sphi 0, %s13
    %p10 = scmp.ge.s32.totalorder %s9, 4
    %s16 = sphi 0, %s28
    %s17 = sphi 0, %s24
    %s18 = sphi 0, %s16
    %s19 = sphi 0, %s17
    %s20 = sphi 0, %s18
    %s21 = sphi 0, %s19
    %s33 = sphi 0, %s35
    %s36 = sphi 0, %s33
    %s37 = sphi 0, %s36
    %s53 = sphi 0, %s37
    %s59 = sphi 0, %s61
    %s62 = sphi 0, %s59
    %s63 = sphi 0, %s62
    %s79 = sphi 0, %s63
    %s85 = sphi 0, %s87
    %s88 = sphi 0, %s85
    %s89 = sphi 0, %s88
    %s105 = sphi 0, %s89
    %s113 = sphi 0, %s115
    %s116 = sphi 0, %s113
    %s117 = sphi 0, %s116
    %s133 = sphi 0, %s117
  $region4: #{_decode_bbox.1} parent=0 // loop_header_branch
    %12 = sbr.rel (%p10) target = $region8
  $region5: #{_decode_bbox.1} parent=0 // loop_body
    %s14 = ssub.s32 %s9, 1
    %s15 = ssub.s32 %s9, 2
    %s22 = sadd.s32 1, %s17
    %p23 = scmp.ge.s32.totalorder %s22, 2
    %s24 = scalar_select %p23, 0, %s22
    %s25 = sadd.s32 1, %s16
    %s26 = scalar_select %p23, %s25, %s16
    %p27 = scmp.ge.s32.totalorder %s26, 1
    %s28 = scalar_select %p27, 0, %s26
    %s29 = ssub.s32 %s17, %s24
    %s30 = ssub.s32 %s16, %s28
    %s31 = sor.u32 %s29, %s30
    %p32 = scmp.eq.s32.totalorder %s31, 0
    %s34 = sadd.s32 %s33, 1
    %s35 = scalar_select %p32, %s33, %s34
    %p38 = pneg %p32
    %p39 = scmp.eq.s32.totalorder %s9, 1
    %p40 = por %p38, %p39
    %p41 = scmp.ne.s32.totalorder %s33, %s36
    %p42 = scmp.eq.s32.totalorder %s9, 0
    %p43 = por %p41, %p42
    %p44 = scmp.ne.s32.totalorder %s33, %s36
    %p45 = scmp.eq.s32.totalorder %s14, 1
    %p46 = por %p44, %p45
    %p47 = scmp.ne.s32.totalorder %s36, %s37
    %p48 = scmp.eq.s32.totalorder %s14, 0
    %p49 = por %p47, %p48
    %p50 = scmp.ne.s32.totalorder %s36, %s37
    %p51 = scmp.eq.s32.totalorder %s15, 1
    %p52 = por %p50, %p51
    %p54 = scmp.ne.s32.totalorder %s37, %s53
    %p55 = scmp.eq.s32.totalorder %s15, 0
    %p56 = por %p54, %p55
    %s57 = ssub.s32 %s16, %s28
    %p58 = scmp.eq.s32.totalorder %s57, 0
    %s60 = sadd.s32 %s59, 1
    %s61 = scalar_select %p58, %s59, %s60
    %p64 = pneg %p58
    %p65 = scmp.eq.s32.totalorder %s9, 1
    %p66 = por %p64, %p65
    %p67 = scmp.ne.s32.totalorder %s59, %s62
    %p68 = scmp.eq.s32.totalorder %s9, 0
    %p69 = por %p67, %p68
    %p70 = scmp.ne.s32.totalorder %s59, %s62
    %p71 = scmp.eq.s32.totalorder %s14, 1
    %p72 = por %p70, %p71
    %p73 = scmp.ne.s32.totalorder %s62, %s63
    %p74 = scmp.eq.s32.totalorder %s14, 0
    %p75 = por %p73, %p74
    %p76 = scmp.ne.s32.totalorder %s62, %s63
    %p77 = scmp.eq.s32.totalorder %s15, 1
    %p78 = por %p76, %p77
    %p80 = scmp.ne.s32.totalorder %s63, %s79
    %p81 = scmp.eq.s32.totalorder %s15, 0
    %p82 = por %p80, %p81
    %s83 = ssub.s32 %s16, %s28
    %p84 = scmp.eq.s32.totalorder %s83, 0
    %s86 = sadd.s32 %s85, 1
    %s87 = scalar_select %p84, %s85, %s86
    %p90 = pneg %p84
    %p91 = scmp.eq.s32.totalorder %s9, 1
    %p92 = por %p90, %p91
    %p93 = scmp.ne.s32.totalorder %s85, %s88
    %p94 = scmp.eq.s32.totalorder %s9, 0
    %p95 = por %p93, %p94
    %p96 = scmp.ne.s32.totalorder %s85, %s88
    %p97 = scmp.eq.s32.totalorder %s14, 1
    %p98 = por %p96, %p97
    %p99 = scmp.ne.s32.totalorder %s88, %s89
    %p100 = scmp.eq.s32.totalorder %s14, 0
    %p101 = por %p99, %p100
    %p102 = scmp.ne.s32.totalorder %s88, %s89
    %p103 = scmp.eq.s32.totalorder %s15, 1
    %p104 = por %p102, %p103
    %p106 = scmp.ne.s32.totalorder %s89, %s105
    %p107 = scmp.eq.s32.totalorder %s15, 0
    %p108 = por %p106, %p107
    %s109 = ssub.s32 %s17, %s24
    %s110 = ssub.s32 %s16, %s28
    %s111 = sor.u32 %s109, %s110
    %p112 = scmp.eq.s32.totalorder %s111, 0
    %s114 = sadd.s32 %s113, 1
    %s115 = scalar_select %p112, %s113, %s114
    %p118 = pneg %p112
    %p119 = scmp.eq.s32.totalorder %s9, 1
    %p120 = por %p118, %p119
    %p121 = scmp.ne.s32.totalorder %s113, %s116
    %p122 = scmp.eq.s32.totalorder %s9, 0
    %p123 = por %p121, %p122
    %p124 = scmp.ne.s32.totalorder %s113, %s116
    %p125 = scmp.eq.s32.totalorder %s14, 1
    %p126 = por %p124, %p125
    %p127 = scmp.ne.s32.totalorder %s116, %s117
    %p128 = scmp.eq.s32.totalorder %s14, 0
    %p129 = por %p127, %p128
    %p130 = scmp.ne.s32.totalorder %s116, %s117
    %p131 = scmp.eq.s32.totalorder %s15, 1
    %p132 = por %p130, %p131
    %p134 = scmp.ne.s32.totalorder %s117, %s133
    %p135 = scmp.eq.s32.totalorder %s15, 0
    %p136 = por %p134, %p135
    %p137 = scmp.le.s32.totalorder 1, %s9
    %p138 = scmp.lt.s32.totalorder %s9, 3
    %p139 = pnand %p137, %p138
    %p140 = pneg %p139
    // Predicated region
    $region9: #{_decode_bbox.1} parent=5 // pred_check
      _
    $region10: #{_decode_bbox.1} parent=5 // pred_check_branch
      %142 = sbr.rel (%p139) target = $region12
    $region11: #{_decode_bbox.1} parent=5 // pred_region
      %s143 = ssub.s32 %s9, 1
      // Predicated region
      $region13: #{_decode_bbox.1} parent=11 // pred_check
        %p144 = pneg %p75
      $region14: #{_decode_bbox.1} parent=11 // pred_check_branch
        %146 = sbr.rel (%p144) target = $region16
      $region15: #{_decode_bbox.1} parent=11 // pred_region
        %p147 = scmp.lt.s32.totalorder %s18, 0
        %s148 = scalar_select %p147, %s18, 0
        %s149 = smul.addr %s148, 8
        %s150 = scalar_lea.vmem %s1, %s149
      $region16: #{_decode_bbox.1} parent=11 // pred_fallthru
        _
      // Predicated region
      $region17: #{_decode_bbox.1} parent=11 // pred_check
        %p151 = pneg %p101
      $region18: #{_decode_bbox.1} parent=11 // pred_check_branch
        %153 = sbr.rel (%p151) target = $region20
      $region19: #{_decode_bbox.1} parent=11 // pred_region
        %p154 = scmp.lt.s32.totalorder %s18, 0
        %s155 = scalar_select %p154, %s18, 0
        %s156 = smul.addr %s155, 8
        %s157 = scalar_lea.vmem %s2, %s156
      $region20: #{_decode_bbox.1} parent=11 // pred_fallthru
        _
    $region12: #{_decode_bbox.1} parent=5 // pred_fallthru
      _
    %p158 = scmp.lt.s32.totalorder %s9, 2
    // Predicated region
    $region21: #{_decode_bbox.1} parent=5 // pred_check
      %p159 = pneg %p158
    $region22: #{_decode_bbox.1} parent=5 // pred_check_branch
      %161 = sbr.rel (%p159) target = $region24
    $region23: #{_decode_bbox.1} parent=5 // pred_region
      // Predicated region
      $region25: #{_decode_bbox.1} parent=23 // pred_check
        %p162 = pneg %p43
      $region26: #{_decode_bbox.1} parent=23 // pred_check_branch
        %164 = sbr.rel (%p162) target = $region28
      $region27: #{_decode_bbox.1} parent=23 // pred_region
        %p165 = scmp.lt.s32.totalorder %s17, 1
        %s166 = scalar_select %p165, %s17, 1
        %p167 = scmp.lt.s32.totalorder %s16, 0
        %s168 = scalar_select %p167, %s16, 0
        %s169 = sadd.s32 %s168, %s166
        %s170 = smul.addr %s169, 8
        %s171 = scalar_lea.vmem %s0, %s170
      $region28: #{_decode_bbox.1} parent=23 // pred_fallthru
        _
    $region24: #{_decode_bbox.1} parent=5 // pred_fallthru
      _
    %p172 = scmp.le.s32.totalorder 1, %s9
    %p173 = scmp.lt.s32.totalorder %s9, 3
    %p174 = pnand %p172, %p173
    %p175 = pneg %p174
    // Predicated region
    $region29: #{_decode_bbox.1} parent=5 // pred_check
      _
    $region30: #{_decode_bbox.1} parent=5 // pred_check_branch
      %177 = sbr.rel (%p174) target = $region32
    $region31: #{_decode_bbox.1} parent=5 // pred_region
      %s178 = ssub.s32 %s9, 1
      %p179 = scmp.lt.s32.totalorder %s19, 1
      %s180 = scalar_select %p179, %s19, 1
      %p181 = scmp.lt.s32.totalorder %s18, 0
      %s182 = scalar_select %p181, %s18, 0
      %s183 = sadd.s32 %s182, %s180
      %s184 = smul.addr %s183, 8
      %s185 = scalar_lea.vmem %s0, %s184
      %p186 = pneg %p49
      %p187 = pneg %p46
      %p188 = scmp.lt.s32.totalorder %s18, 0
      %s189 = scalar_select %p188, %s18, 0
      %s190 = smul.addr %s189, 8
      %s191 = scalar_lea.vmem %s1, %s190
      %p192 = pneg %p75
      %p193 = pneg %p72
      %p194 = scmp.lt.s32.totalorder %s18, 0
      %s195 = scalar_select %p194, %s18, 0
      %s196 = smul.addr %s195, 8
      %s197 = scalar_lea.vmem %s2, %s196
      %p198 = pneg %p101
      %p199 = pneg %p98
      %p200 = pneg %p129
      %p201 = pneg %p126
      %p202 = scmp.lt.s32.totalorder %s19, 1
      %s203 = scalar_select %p202, %s19, 1
      %p204 = scmp.lt.s32.totalorder %s18, 0
      %s205 = scalar_select %p204, %s18, 0
      %s206 = sadd.s32 %s205, %s203
      %s207 = smul.addr %s206, 8
      %s208 = scalar_lea.vmem %s3, %s207
      %p209 = scmp.lt.s32.totalorder %s19, 1
      %s210 = scalar_select %p209, %s19, 1
      %p211 = scmp.lt.s32.totalorder %s18, 0
      %s212 = scalar_select %p211, %s18, 0
      %s213 = sadd.s32 %s212, %s210
      %s214 = smul.addr %s213, 8
      %s215 = scalar_lea.vmem %s0, %s214
      %p216 = scmp.lt.s32.totalorder %s18, 0
      %s217 = scalar_select %p216, %s18, 0
      %s218 = smul.addr %s217, 8
      %s219 = scalar_lea.vmem %s1, %s218
      %p220 = scmp.lt.s32.totalorder %s18, 0
      %s221 = scalar_select %p220, %s18, 0
      %s222 = smul.addr %s221, 8
      %s223 = scalar_lea.vmem %s2, %s222
      %p224 = scmp.lt.s32.totalorder %s19, 1
      %s225 = scalar_select %p224, %s19, 1
      %p226 = scmp.lt.s32.totalorder %s18, 0
      %s227 = scalar_select %p226, %s18, 0
      %s228 = sadd.s32 %s227, %s225
      %s229 = smul.addr %s228, 8
      %s230 = scalar_lea.vmem %s3, %s229
      %v231 = vld [vmem:[%s215] sm:$0xff]
      %v232 = vld [vmem:[%s219] sm:$0xff]
      %v233 = vld [vmem:[%s223] sm:$0xff]
      %v234 = vlaneseq
      %v235 = vand.u32 %v234, 127
      %v236 = vand.u32 %v235, 3
      %vm237 = vcmp.lt.s32.totalorder %v236, 2
      %v238 = vand.u32 %v235, 4
      %vm239 = vcmp.eq.s32.totalorder %v238, 0
      %vm240 = vcmp.eq.s32.totalorder %v236, 0
      %vm241 = vcmp.eq.s32.totalorder %v236, 1
      %v242 = vsel %vm241, 0.1, 0.2
      %v243 = vsel %vm240, 0.1, %v242
      %v244 = vmul.f32 %v231, %v243
      %v245 = vadd.f32 %v244, 0.0
      %v246 = vsel %vm239, %v245, 0.0
      %v247 = vsub.f32 %v245, %v246
      %248 = vrot.lane.b32.xlu0 %v246, 2
      %v249 = vpop.permute.xlu0 %248
      %250 = vrot.lane.b32.xlu0 %v246, 126
      %v251 = vpop.permute.xlu0 %250
      %v252 = vadd.f32 %v249, %v251
      %253 = vrot.lane.b32.xlu0 %v247, 2
      %v254 = vpop.permute.xlu0 %253
      %255 = vrot.lane.b32.xlu0 %v247, 126
      %v256 = vpop.permute.xlu0 %255
      %v257 = vadd.f32 %v254, %v256
      %v258 = vsel %vm239, %v252, %v257
      %v259 = vsel %vm237, %v245, %v258
      %v260 = vsel %vm237, %v258, %v245
      %v261 = vsel %vm237, -0.5, 0.5
      %v262 = vmul.f32 %v260, 1.442695
      %v263 = vpow.pop %v262
      %v264 = vmul.f32 %v261, %v263
      %v265 = vadd.f32 %v259, %v264
      %v266 = vmul.f32 %v233, %v265
      %v267 = vadd.f32 %v232, %v266
      %268 = vst [vmem:[%s230] sm:$0xff] %v267
      %p269 = scmp.lt.s32.totalorder %s19, 1
      %s270 = scalar_select %p269, %s19, 1
      %p271 = scmp.lt.s32.totalorder %s18, 0
      %s272 = scalar_select %p271, %s18, 0
      %s273 = sadd.s32 %s272, %s270
      %s274 = smul.addr %s273, 8
      %s275 = scalar_lea.vmem %s3, %s274
      // Predicated region
      $region33: #{_decode_bbox.1} parent=31 // pred_check
        %p276 = pneg %p126
      $region34: #{_decode_bbox.1} parent=31 // pred_check_branch
        %278 = sbr.rel (%p276) target = $region36
      $region35: #{_decode_bbox.1} parent=31 // pred_region
        _
      $region36: #{_decode_bbox.1} parent=31 // pred_fallthru
        _
    $region32: #{_decode_bbox.1} parent=5 // pred_fallthru
      _
    %p279 = scmp.le.s32.totalorder 2, %s9
    // Predicated region
    $region37: #{_decode_bbox.1} parent=5 // pred_check
      %p280 = pneg %p279
    $region38: #{_decode_bbox.1} parent=5 // pred_check_branch
      %282 = sbr.rel (%p280) target = $region40
    $region39: #{_decode_bbox.1} parent=5 // pred_region
      %s283 = ssub.s32 %s9, 2
      // Predicated region
      $region41: #{_decode_bbox.1} parent=39 // pred_check
        %p284 = pneg %p132
      $region42: #{_decode_bbox.1} parent=39 // pred_check_branch
        %286 = sbr.rel (%p284) target = $region44
      $region43: #{_decode_bbox.1} parent=39 // pred_region
        %p287 = scmp.lt.s32.totalorder %s21, 1
        %s288 = scalar_select %p287, %s21, 1
        %p289 = scmp.lt.s32.totalorder %s20, 0
        %s290 = scalar_select %p289, %s20, 0
        %s291 = sadd.s32 %s290, %s288
        %s292 = smul.addr %s291, 8
        %s293 = scalar_lea.vmem %s3, %s292
      $region44: #{_decode_bbox.1} parent=39 // pred_fallthru
        _
    $region40: #{_decode_bbox.1} parent=5 // pred_fallthru
      _
  $region6: #{_decode_bbox.1} parent=0 // loop_footer
    %s13 = sadd.s32 1, %s9
  $region7: #{_decode_bbox.1} parent=0 // loop_footer_branch
    %8 = sbr.rel target = $region3
  $region8: #{_decode_bbox.1} parent=0 // loop_exit
    _

</llo_original>
